<compile_context>
chip_gen: v7x
topology: tpu7x:2x2x1
jax: 0.10.0
libtpu: 0.0.40
codegen_flags: <defaults>
</compile_context>

<pallas_src>
import functools
import math

import jax
import jax.numpy as jnp
from jax.experimental import pallas as pl
from jax.experimental.pallas import tpu as pltpu  # noqa: F401  (TPU backend assumed)

# Mimics the PyTorch-side global side-effect dict.
FEATURE_MAP = {}


# --------------------------- in-kernel helpers --------------------------------

def _mm(x, w):
    """bf16 MXU matmul with f32 accumulation."""
    return jnp.dot(x.astype(jnp.bfloat16), w.astype(jnp.bfloat16),
                   preferred_element_type=jnp.float32)


def _layernorm(x, g, b, eps=1e-5):
    # torch nn.LayerNorm: biased variance, eps=1e-5, f32 math.
    mean = jnp.mean(x, axis=-1, keepdims=True)
    var = jnp.mean(jnp.square(x - mean), axis=-1, keepdims=True)
    return (x - mean) * jax.lax.rsqrt(var + eps) * g + b


def _mha(q, k, v, B, Sq, Skv, H, Dh):
    """Multi-head attention on batch-major flattened (B*S, D) q/k/v.

    Short static loop over heads (static lane slices); each head is batched over
    B with a 3-D einsum so all batches hit the MXU together.  Softmax in f32,
    matmuls in bf16, reciprocal on the EUP.
    """
    scale = 1.0 / math.sqrt(Dh)
    head_outs = []
    for h in range(H):
        sl = slice(h * Dh, (h + 1) * Dh)
        qh = q[:, sl].reshape(B, Sq, Dh).astype(jnp.bfloat16)
        kh = k[:, sl].reshape(B, Skv, Dh).astype(jnp.bfloat16)
        vh = v[:, sl].reshape(B, Skv, Dh).astype(jnp.bfloat16)
        s = jnp.einsum('bqd,bkd->bqk', qh, kh,
                       preferred_element_type=jnp.float32) * scale
        m = jnp.max(s, axis=-1, keepdims=True)
        p = jnp.exp(s - m)
        denom = jnp.sum(p, axis=-1, keepdims=True)
        p = p * pl.reciprocal(denom, approx=True)
        oh = jnp.einsum('bqk,bkd->bqd', p.astype(jnp.bfloat16), vh,
                        preferred_element_type=jnp.float32)
        head_outs.append(oh.reshape(B * Sq, Dh))
    return jnp.concatenate(head_outs, axis=-1)          # (B*Sq, D) f32


# ------------------------------ Pallas kernels --------------------------------

def _rmsnorm_kernel(x_ref, w_ref, o_ref):
    # LlamaRMSNorm (weight-only, eps=1e-6).  TODO(synk): verify the checkpoint's
    # final_layernorm is RMSNorm and not nn.LayerNorm.
    x = x_ref[...]
    ms = jnp.mean(x * x, axis=-1, keepdims=True)
    o_ref[...] = x * jax.lax.rsqrt(ms + 1e-6) * w_ref[...]


def _enc_layer_kernel(B, S, H,
                      x_ref, wqkv_ref, bqkv_ref, wo_ref, bo_ref,
                      g1_ref, be1_ref, w1_ref, b1_ref, w2_ref, b2_ref,
                      g2_ref, be2_ref, o_ref):
    """Fused nn.TransformerEncoderLayer (post-norm, ReLU FFN, dropout = eval no-op)."""
    D = x_ref.shape[-1]
    Dh = D // H
    x = x_ref[...]                                        # (B*S, D) f32
    # fused QKV projection
    qkv = _mm(x, wqkv_ref[...]) + bqkv_ref[...]           # (B*S, 3D)
    q, k, v = qkv[:, :D], qkv[:, D:2 * D], qkv[:, 2 * D:]
    attn = _mha(q, k, v, B, S, S, H, Dh)
    attn = _mm(attn, wo_ref[...]) + bo_ref[...]
    x = _layernorm(x + attn, g1_ref[...], be1_ref[...])
    # FFN: Linear -> ReLU -> Linear, then residual + LayerNorm
    h = jnp.maximum(_mm(x, w1_ref[...]) + b1_ref[...], 0.0)
    ff = _mm(h, w2_ref[...]) + b2_ref[...]
    o_ref[...] = _layernorm(x + ff, g2_ref[...], be2_ref[...])


def _dec_layer_kernel(B, S, H,
                      t_ref, m_ref,
                      sa_wqkv_ref, sa_bqkv_ref, sa_wo_ref, sa_bo_ref,
                      g1_ref, be1_ref,
                      ca_wq_ref, ca_bq_ref, ca_wkv_ref, ca_bkv_ref,
                      ca_wo_ref, ca_bo_ref,
                      g2_ref, be2_ref,
                      w1_ref, b1_ref, w2_ref, b2_ref,
                      g3_ref, be3_ref, o_ref):
    """Fused nn.TransformerDecoderLayer (self-attn + cross-attn + FFN, post-norm)."""
    D = t_ref.shape[-1]
    Dh = D // H
    t = t_ref[...]                                        # (B*S, D) f32
    mem = m_ref[...]                                      # (B*S, D) f32
    # self-attention (fused QKV)
    qkv = _mm(t, sa_wqkv_ref[...]) + sa_bqkv_ref[...]
    q, k, v = qkv[:, :D], qkv[:, D:2 * D], qkv[:, 2 * D:]
    sa = _mha(q, k, v, B, S, S, H, Dh)
    sa = _mm(sa, sa_wo_ref[...]) + sa_bo_ref[...]
    t = _layernorm(t + sa, g1_ref[...], be1_ref[...])
    # cross-attention (Q from tgt, fused KV from memory)
    q = _mm(t, ca_wq_ref[...]) + ca_bq_ref[...]
    kv = _mm(mem, ca_wkv_ref[...]) + ca_bkv_ref[...]
    k, v = kv[:, :D], kv[:, D:]
    ca = _mha(q, k, v, B, S, S, H, Dh)
    ca = _mm(ca, ca_wo_ref[...]) + ca_bo_ref[...]
    t = _layernorm(t + ca, g2_ref[...], be2_ref[...])
    # FFN
    h = jnp.maximum(_mm(t, w1_ref[...]) + b1_ref[...], 0.0)
    ff = _mm(h, w2_ref[...]) + b2_ref[...]
    o_ref[...] = _layernorm(t + ff, g3_ref[...], be3_ref[...])


def _latent_reparam_kernel(x_ref, w_ref, b_ref, eps_ref, z_ref):
    # to_latent Linear, chunk into (mean, log_var), reparameterize.
    lat = _mm(x_ref[...], w_ref[...]) + b_ref[...]        # (B*S, 2L)
    L = lat.shape[-1] // 2
    mean = lat[:, :L]
    log_var = lat[:, L:]
    z_ref[...] = mean + eps_ref[...] * jnp.exp(0.5 * log_var)


def _linear_kernel(x_ref, w_ref, b_ref, o_ref):
    o_ref[...] = _mm(x_ref[...], w_ref[...]) + b_ref[...]


# ----------------------------- kernel wrappers --------------------------------

def rmsnorm(x2d, w):
    n, d = x2d.shape
    return pl.pallas_call(
        _rmsnorm_kernel,
        out_shape=jax.ShapeDtypeStruct((n, d), jnp.float32),
    )(x2d, w.reshape(1, d))


def encoder_layer(x2d, p, B, S, H):
    n, d = x2d.shape
    return pl.pallas_call(
        functools.partial(_enc_layer_kernel, B, S, H),
        out_shape=jax.ShapeDtypeStruct((n, d), jnp.float32),
    )(x2d,
      p["wqkv"], p["bqkv"], p["wo"], p["bo"],
      p["ln1_g"], p["ln1_b"],
      p["w1"], p["b1"], p["w2"], p["b2"],
      p["ln2_g"], p["ln2_b"])


def decoder_layer(t2d, m2d, p, B, S, H):
    n, d = t2d.shape
    return pl.pallas_call(
        functools.partial(_dec_layer_kernel, B, S, H),
        out_shape=jax.ShapeDtypeStruct((n, d), jnp.float32),
    )(t2d, m2d,
      p["sa_wqkv"], p["sa_bqkv"], p["sa_wo"], p["sa_bo"],
      p["ln1_g"], p["ln1_b"],
      p["ca_wq"], p["ca_bq"], p["ca_wkv"], p["ca_bkv"], p["ca_wo"], p["ca_bo"],
      p["ln2_g"], p["ln2_b"],
      p["w1"], p["b1"], p["w2"], p["b2"],
      p["ln3_g"], p["ln3_b"])


def latent_reparam(x2d, p, eps):
    n = x2d.shape[0]
    latent = p["w"].shape[1] // 2
    return pl.pallas_call(
        _latent_reparam_kernel,
        out_shape=jax.ShapeDtypeStruct((n, latent), jnp.float32),
    )(x2d, p["w"], p["b"], eps)


def linear(x2d, p):
    n = x2d.shape[0]
    dout = p["w"].shape[1]
    return pl.pallas_call(
        _linear_kernel,
        out_shape=jax.ShapeDtypeStruct((n, dout), jnp.float32),
    )(x2d, p["w"], p["b"])


# ------------------------------ model forward ---------------------------------

def final_layernorm_v2_forward(params, x, heads, noise_key):
    """x: (S, B, D) float32 (PyTorch seq-first layout). Returns rec of same shape."""
    S, B, D = x.shape

    # Work batch-major, flattened to (B*S, D): rows of one batch are contiguous,
    # so each fused layer kernel can run attention entirely in VMEM.  The two
    # layout transposes below are the only inter-kernel data movement.
    xb = jnp.transpose(x, (1, 0, 2)).reshape(B * S, D)

    # 1) original final layernorm (assumed LlamaRMSNorm)
    x_norm = rmsnorm(xb, params["rms_w"])

    # 2) VAE encode: fused transformer-encoder layers
    h = x_norm
    for lp in params["enc"]:
        h = encoder_layer(h, lp, B, S, heads)

    # to_latent + reparameterize fused in one kernel.
    # TODO(synk): noise uses a fixed JAX key, not torch.randn_like semantics.
    latent_dim = params["to_latent"]["w"].shape[1] // 2
    eps = jax.random.normal(noise_key, (B * S, latent_dim), jnp.float32)
    z = latent_reparam(h, params["to_latent"], eps)

    # 3) VAE decode (tgt=z, memory=z) + output projection
    t = z
    for lp in params["dec"]:
        t = decoder_layer(t, z, lp, B, S, heads)
    rec2d = linear(t, params["out"])

    def to_sbd(a2d):
        return jnp.transpose(a2d.reshape(B, S, D), (1, 0, 2))

    rec = to_sbd(rec2d)

    global FEATURE_MAP
    if "rec" in FEATURE_MAP:
        FEATURE_MAP = {}
    FEATURE_MAP["rec"] = rec          # NOTE: holds tracers if this fn is jitted
    FEATURE_MAP["ori"] = to_sbd(x_norm)
    return rec


# ------------------------------ parameter init --------------------------------

def init_params(key, d_model, d_ff, latent_dim, n_layers, heads):
    keys = iter(jax.random.split(key, 4096))

    def w(din, dout):
        # matmul weights in bf16 (the reference VAE is .bfloat16())
        return (jax.random.normal(next(keys), (din, dout), jnp.float32)
                * 0.02).astype(jnp.bfloat16)

    def b(dout):
        return jnp.zeros((1, dout), jnp.float32)

    def ln():
        return jnp.ones((1, d_model), jnp.float32), jnp.zeros((1, d_model), jnp.float32)

    def enc_layer():
        g1, be1 = ln()
        g2, be2 = ln()
        return {
            "wqkv": w(d_model, 3 * d_model), "bqkv": b(3 * d_model),
            "wo": w(d_model, d_model), "bo": b(d_model),
            "ln1_g": g1, "ln1_b": be1,
            "w1": w(d_model, d_ff), "b1": b(d_ff),
            "w2": w(d_ff, d_model), "b2": b(d_model),
            "ln2_g": g2, "ln2_b": be2,
        }

    def dec_layer():
        g1, be1 = ln()
        g2, be2 = ln()
        g3, be3 = ln()
        return {
            "sa_wqkv": w(d_model, 3 * d_model), "sa_bqkv": b(3 * d_model),
            "sa_wo": w(d_model, d_model), "sa_bo": b(d_model),
            "ln1_g": g1, "ln1_b": be1,
            "ca_wq": w(d_model, d_model), "ca_bq": b(d_model),
            "ca_wkv": w(d_model, 2 * d_model), "ca_bkv": b(2 * d_model),
            "ca_wo": w(d_model, d_model), "ca_bo": b(d_model),
            "ln2_g": g2, "ln2_b": be2,
            "w1": w(d_model, d_ff), "b1": b(d_ff),
            "w2": w(d_ff, d_model), "b2": b(d_model),
            "ln3_g": g3, "ln3_b": be3,
        }

    return {
        "rms_w": jnp.ones((d_model,), jnp.float32),
        "enc": [enc_layer() for _ in range(n_layers)],
        "to_latent": {"w": w(d_model, 2 * latent_dim), "b": b(2 * latent_dim)},
        "dec": [dec_layer() for _ in range(n_layers)],
        "out": {"w": w(d_model, d_model), "b": b(d_model)},
    }


# ----------------------------------- main --------------------------------------

if __name__ == "__main__":
    # Small shapes consistent with vae_conf (input_dim == latent_dim, d_ff < d_model).
    S, B, D = 8, 2, 32          # seq, batch, hidden
    HEADS, D_FF, LATENT, N_LAYERS = 4, 16, 32, 2

    key = jax.random.PRNGKey(0)
    k_x, k_p, k_eps = jax.random.split(key, 3)

    params = init_params(k_p, D, D_FF, LATENT, N_LAYERS, HEADS)
    x = jax.random.normal(k_x, (S, B, D), jnp.float32)

    rec = final_layernorm_v2_forward(params, x, HEADS, k_eps)
    rec = jax.block_until_ready(rec)
    assert rec.shape == (S, B, D) and rec.dtype == jnp.float32
    assert bool(jnp.all(jnp.isfinite(rec)))
    print("KERNEL_OK")
</pallas_src>

<mosaic_0001>
module attributes {stable_mosaic.version = 11 : i64} {
  func.func @_rmsnorm_kernel(%arg0: memref<16x32xf32, #tpu.memory_space<vmem>>, %arg1: memref<1x32xf32, #tpu.memory_space<vmem>>, %arg2: memref<16x32xf32, #tpu.memory_space<vmem>>) attributes {dimension_semantics = [], scalar_prefetch = 0 : i64, scratch_operands = 0 : i64, tpu.core_type = #tpu.core_type<tc>} {
    %c0 = arith.constant 0 : index
    %c0_0 = arith.constant 0 : index
    %0 = vector.load %arg0[%c0, %c0_0] : memref<16x32xf32, #tpu.memory_space<vmem>>, vector<16x32xf32>
    %1 = arith.mulf %0, %0 : vector<16x32xf32>
    %cst = arith.constant dense<0.000000e+00> : vector<16xf32>
    %2 = vector.multi_reduction <add>, %1, %cst [1] : vector<16x32xf32> to vector<16xf32>
    %3 = vector.shape_cast %2 : vector<16xf32> to vector<16x1xf32>
    %cst_1 = arith.constant 3.200000e+01 : f32
    %4 = vector.broadcast %cst_1 : f32 to vector<16x1xf32>
    %5 = arith.divf %3, %4 : vector<16x1xf32>
    %cst_2 = arith.constant 9.99999997E-7 : f32
    %6 = vector.broadcast %cst_2 : f32 to vector<16x1xf32>
    %7 = arith.addf %5, %6 : vector<16x1xf32>
    %8 = math.rsqrt %7 : vector<16x1xf32>
    %9 = vector.broadcast %8 : vector<16x1xf32> to vector<16x32xf32>
    %10 = arith.mulf %0, %9 : vector<16x32xf32>
    %c0_3 = arith.constant 0 : index
    %c0_4 = arith.constant 0 : index
    %11 = vector.load %arg1[%c0_3, %c0_4] : memref<1x32xf32, #tpu.memory_space<vmem>>, vector<1x32xf32>
    %12 = vector.broadcast %11 : vector<1x32xf32> to vector<16x32xf32>
    %13 = arith.mulf %10, %12 : vector<16x32xf32>
    %c0_5 = arith.constant 0 : index
    %c0_6 = arith.constant 0 : index
    %14 = vector.load %arg2[%c0_5, %c0_6] : memref<16x32xf32, #tpu.memory_space<vmem>>, vector<16x32xf32>
    tpu.vector_store %arg2[%c0_5, %c0_6], %13 {strides = array<i32>} : memref<16x32xf32, #tpu.memory_space<vmem>>, vector<16x32xf32>,
    return
  }
}

</mosaic_0001>

<llo_original>
// kernel: tpu_custom_call.1
$region0: #{tpu_custom_call.1}
  #allocation0 [shape = 'u32[]', space=smem, size = 0x4, offset = 0x4, fixed_abs, tag = 'smem constant byte address 0x4 - core index']
  #allocation1 [shape = 'u32[144,128]{1,0:T(1,128)}', space=vmem, size = 0x12000, scoped, tag = 'internal scratch']
  %s0 = inlined_call_operand.hbm [shape: f32[16,32], index: 0, kind: input, shape index: {}]
  %s1 = inlined_call_operand.vmem [shape: f32[1,32], index: 1, kind: input, shape index: {}]
  %s2 = inlined_call_operand.hbm [shape: f32[16,32], index: 2, kind: output, shape index: {}]
  %s3 = sld [smem:[#allocation0]]
  $region22: #{tpu_custom_call.1} parent=0
    _
  %s5 = ssub.s32 1, %s3
  %s6 = scalar_select 0, %s5, %s3
  $region1: #{tpu_custom_call.1} parent=0
    #allocation2 [shape = 'u8[8192]{0}', space=vmem, size = 0x2000, scoped, tag = 'input window, operand 0, single buffered']
    #allocation3 [shape = 's32[1]{0}', space=sflag, size = 0x4, scoped, tag = 'scoped memory for tpu_custom_call.1']
    #allocation4 [shape = 's32[1]{0}', space=sflag, size = 0x4, scoped, tag = 'scoped memory for tpu_custom_call.1']
    #allocation5 [shape = 'u8[8192]{0}', space=vmem, size = 0x2000, scoped, tag = 'output window, operand 0, single buffered']
    %7 = vsyncpa [#allocation3], 0
    %8 = vsyncpa [#allocation4], 0
    // Predicated region
    $region2: #{tpu_custom_call.1} parent=1 // pred_check
      _
    $region3: #{tpu_custom_call.1} parent=1 // pred_check_branch
      %10 = sbr.rel (0) target = $region5
    $region4: #{tpu_custom_call.1} parent=1 // pred_region
      %s12 = ssub.s32 256, 256
      %13 = vsyncadd [#allocation3], %s12
      %s14 = sshll.u32 [#allocation2], 4
      %s15 = int_to_ptr.vmem [resolvable:$true] %s14
      %20 = dma.hbm_to_vmem [thread:$0]  %s0, 256, %s15, [#allocation3], 128, 128, 8
    $region5: #{tpu_custom_call.1} parent=1 // pred_fallthru
      _
    // Predicated region
    $region6: #{tpu_custom_call.1} parent=1 // pred_check
      _
    $region7: #{tpu_custom_call.1} parent=1 // pred_check_branch
      %22 = sbr.rel (0) target = $region9
    $region8: #{tpu_custom_call.1} parent=1 // pred_region
      _
    $region9: #{tpu_custom_call.1} parent=1 // pred_fallthru
      _
    // Predicated region
    $region10: #{tpu_custom_call.1} parent=1 // pred_check
      _
    $region11: #{tpu_custom_call.1} parent=1 // pred_check_branch
      %24 = sbr.rel (0) target = $region13
    $region12: #{tpu_custom_call.1} parent=1 // pred_region
      %25 = dma.done [#allocation3], 256
    $region13: #{tpu_custom_call.1} parent=1 // pred_fallthru
      _
    %v26 = vld [vmem:[#allocation2] sm:$0xff]
    %v27 = vld [vmem:[#allocation2 + $0x8] sm:$0xff]
    %v28 = vmul.f32 %v26, %v26
    %v29 = vmul.f32 %v27, %v27
    %vm30 = vcmask 261120
    %v31 = vsel %vm30, %v28, 0.0
    %32 = vadd.xlane.f32.xlu0 %v31
    %v33 = vpop.xlane.xlu0 %32
    %v34 = vsel %vm30, %v29, 0.0
    %35 = vadd.xlane.f32.xlu0 %v34
    %v36 = vpop.xlane.xlu0 %35
    %v37 = vrcp.pop 32.0
    %v38 = vmul.f32 %v33, %v37
    %v39 = vmul.f32 %v36, %v37
    %v40 = vadd.f32 %v38, 1e-06
    %v41 = vadd.f32 %v39, 1e-06
    %v42 = vrsqrt.pop %v40
    %v43 = vrsqrt.pop %v41
    %v44 = vmul.f32 %v26, %v42
    %v45 = vmul.f32 %v27, %v43
    %v46 = vld [vmem:[%s1] sm:$0x1]
    %v48 = vlaneseq
    %v49 = vshrl.u32 %v48, 7
    %v50 = vsub.s32 0, %v49
    %v51 = vrot.slane %v46, %v50
    %v53 = vmul.f32 %v44, %v51
    %v54 = vmul.f32 %v45, %v51
    %55 = vst.msk [vmem:[#allocation5] sm:$0xff] %vm30, %v53
    %56 = vst.msk [vmem:[#allocation5 + $0x8] sm:$0xff] %vm30, %v54
    // Predicated region
    $region14: #{tpu_custom_call.1} parent=1 // pred_check
      _
    $region15: #{tpu_custom_call.1} parent=1 // pred_check_branch
      %58 = sbr.rel (0) target = $region17
    $region16: #{tpu_custom_call.1} parent=1 // pred_region
      %s60 = ssub.s32 256, 256
      %61 = vsyncadd [#allocation4], %s60
      %s62 = sshll.u32 [#allocation5], 4
      %s63 = int_to_ptr.vmem [resolvable:$true] %s62
      %68 = dma.vmem_to_hbm [thread:$0]  %s63, 256, %s2, [#allocation4], 128, 128, 8
    $region17: #{tpu_custom_call.1} parent=1 // pred_fallthru
      _
    // Predicated region
    $region18: #{tpu_custom_call.1} parent=1 // pred_check
      _
    $region19: #{tpu_custom_call.1} parent=1 // pred_check_branch
      %70 = sbr.rel (0) target = $region21
    $region20: #{tpu_custom_call.1} parent=1 // pred_region
      %71 = dma.done [#allocation4], 256
    $region21: #{tpu_custom_call.1} parent=1 // pred_fallthru
      _
    %72 = vsyncpa [#allocation3], 1
    %73 = vsyncpa [#allocation4], 1

</llo_original>
